<compile_context>
chip_gen: v7x
topology: tpu7x:2x2x1
jax: 0.10.0
libtpu: 0.0.40
codegen_flags: <defaults>
</compile_context>

<pallas_src>
import jax
import jax.numpy as jnp
from jax.experimental import pallas as pl
from jax.experimental.pallas import tpu as pltpu


# --------------------------------------------------------------------------
# Fused kernel: all three layers, tiled over the output (N) dimension.
# Layers 1-2 are recomputed per N-tile (their FLOPs are negligible vs the
# W3-tile matmul), which keeps the N axis "parallel"-safe for megacore.
# --------------------------------------------------------------------------
def _fused_kernel(x_ref, w1_ref, b1_ref, w2_ref, b2_ref, w3_ref, b3_ref, o_ref):
    x = x_ref[...].astype(jnp.bfloat16)
    h = jnp.dot(x, w1_ref[...], preferred_element_type=jnp.float32) + b1_ref[...]
    h = jnp.maximum(h, 0.0)                       # ReLU (+ eval Dropout = id)
    h = jnp.dot(h.astype(jnp.bfloat16), w2_ref[...],
                preferred_element_type=jnp.float32) + b2_ref[...]
    h = jnp.maximum(h, 0.0)
    o = jnp.dot(h.astype(jnp.bfloat16), w3_ref[...],
                preferred_element_type=jnp.float32) + b3_ref[...]
    o_ref[...] = jnp.tanh(o)


# --------------------------------------------------------------------------
# Split path, Kernel A: layers 1-2 with W1 streamed over K tiles.
# --------------------------------------------------------------------------
def _hidden_kernel(x_ref, w1_ref, b1_ref, w2_ref, b2_ref, h_ref, acc_ref):
    k = pl.program_id(0)

    @pl.when(k == 0)
    def _():
        acc_ref[...] = jnp.zeros_like(acc_ref)

    acc_ref[...] += jnp.dot(x_ref[...].astype(jnp.bfloat16), w1_ref[...],
                            preferred_element_type=jnp.float32)

    @pl.when(k == pl.num_programs(0) - 1)
    def _():
        h = jnp.maximum(acc_ref[...] + b1_ref[...], 0.0)
        h = jnp.dot(h.astype(jnp.bfloat16), w2_ref[...],
                    preferred_element_type=jnp.float32) + b2_ref[...]
        h_ref[...] = jnp.maximum(h, 0.0).astype(h_ref.dtype)


# --------------------------------------------------------------------------
# Split path, Kernel B: layer 3 (Linear + Tanh), W3 streamed over N tiles.
# --------------------------------------------------------------------------
def _output_kernel(h_ref, w3_ref, b3_ref, o_ref):
    o = jnp.dot(h_ref[...], w3_ref[...],
                preferred_element_type=jnp.float32) + b3_ref[...]
    o_ref[...] = jnp.tanh(o)


# --------------------------------------------------------------------------
# VMEM sizing helpers (generation-aware clamp, accurate footprint + headroom).
# --------------------------------------------------------------------------
def _vmem_cap_bytes():
    cap = 64 << 20                     # v7x per-TC physical VMEM (worst case)
    try:
        cap = int(getattr(pltpu.get_tpu_info(), "vmem_capacity_bytes", cap))
    except Exception:
        pass
    return (cap * 3) // 4              # headroom for Mosaic internal scratch


def _vmem_limit(footprint_bytes, cap):
    # footprint already counts buffer multiplicity; add ~25% headroom.
    return int(min(max((footprint_bytes * 5) // 4, 16 << 20), cap))


def _pick_tn(out_dim, tn_max):
    """Choose a lane-dense output tile width. Returns (tn, padded_out_dim)."""
    if out_dim <= tn_max:
        # Split into two even lane-dense tiles when possible so v7x megacore
        # keeps both TensorCores busy; otherwise one full-width tile (no pad).
        if out_dim >= 256 and out_dim % 256 == 0:
            return out_dim // 2, out_dim
        return out_dim, out_dim
    tn = max(128, (tn_max // 128) * 128)
    if out_dim % tn == 0:
        return tn, out_dim
    return tn, pl.cdiv(out_dim, tn) * tn


# --------------------------------------------------------------------------
# Forward pass.
# --------------------------------------------------------------------------
def generator_forward(x, params, img_size, *, tn_max=1024, tk_max=512,
                      force_split=False):
    """x: (B, fmri_dim) float32.  Returns (B, 1, img_size, img_size) float32."""
    w1, b1, w2, b2, w3, b3 = params               # BN folded, weights in bf16
    B, fmri_dim = x.shape
    H = w1.shape[1]
    out_dim = img_size * img_size
    cap = _vmem_cap_bytes()

    # ---- output (N) tiling -------------------------------------------------
    tn, out_dim_p = _pick_tn(out_dim, tn_max)
    if w3.shape[1] != out_dim_p:
        pad = out_dim_p - w3.shape[1]
        w3 = jnp.pad(w3, ((0, 0), (0, pad)))
        b3 = jnp.pad(b3, ((0, 0), (0, pad)))
    n_tiles = out_dim_p // tn

    # per-operand VMEM bytes (x2: Pallas double-buffers each operand)
    res_12 = 2 * (x.size * 4 + w1.size * 2 + b1.size * 4
                  + w2.size * 2 + b2.size * 4)
    tile_3 = 2 * (H * tn * 2 + tn * 4 + B * tn * 4)

    use_fused = (not force_split) and (res_12 + tile_3) * 5 // 4 <= cap

    if use_fused:
        out_p = pl.pallas_call(
            _fused_kernel,
            out_shape=jax.ShapeDtypeStruct((B, out_dim_p), jnp.float32),
            grid=(n_tiles,),
            in_specs=[
                pl.BlockSpec(x.shape, lambda j: (0, 0)),
                pl.BlockSpec(w1.shape, lambda j: (0, 0)),
                pl.BlockSpec(b1.shape, lambda j: (0, 0)),
                pl.BlockSpec(w2.shape, lambda j: (0, 0)),
                pl.BlockSpec(b2.shape, lambda j: (0, 0)),
                pl.BlockSpec((H, tn), lambda j: (0, j)),   # W3 tile streamed
                pl.BlockSpec((1, tn), lambda j: (0, j)),
            ],
            out_specs=pl.BlockSpec((B, tn), lambda j: (0, j)),
            compiler_params=pltpu.CompilerParams(
                dimension_semantics=("parallel",),
                vmem_limit_bytes=_vmem_limit(res_12 + tile_3, cap)),
            cost_estimate=pl.CostEstimate(
                flops=2 * B * (fmri_dim * H + H * H) * n_tiles
                      + 2 * B * H * out_dim_p,
                transcendentals=B * out_dim_p,
                bytes_accessed=(x.size * 4 + w1.size * 2 + b1.size * 4
                                + w2.size * 2 + b2.size * 4 + w3.size * 2
                                + b3.size * 4 + B * out_dim_p * 4)),
        )(x, w1, b1, w2, b2, w3, b3)
        return out_p[:, :out_dim].reshape(B, 1, img_size, img_size)

    # ---- split path: layers 1-2 with K-tiled W1 streaming -------------------
    if fmri_dim <= tk_max:
        tk = fmri_dim
    else:
        tk = max(128, (tk_max // 128) * 128)
        fmri_p = pl.cdiv(fmri_dim, tk) * tk
        if fmri_p != fmri_dim:                    # zero-pad keeps the dot exact
            x = jnp.pad(x, ((0, 0), (0, fmri_p - fmri_dim)))
            w1 = jnp.pad(w1, ((0, fmri_p - fmri_dim), (0, 0)))
    kt = x.shape[1] // tk

    foot_a = (2 * (B * tk * 4 + tk * H * 2)                 # streamed x / W1
              + 2 * (b1.size * 4 + w2.size * 2 + b2.size * 4 + B * H * 2)
              + B * H * 4)                                   # f32 accumulator
    h2 = pl.pallas_call(
        _hidden_kernel,
        out_shape=jax.ShapeDtypeStruct((B, H), jnp.bfloat16),
        grid=(kt,),
        in_specs=[
            pl.BlockSpec((B, tk), lambda k: (0, k)),
            pl.BlockSpec((tk, H), lambda k: (k, 0)),
            pl.BlockSpec(b1.shape, lambda k: (0, 0)),
            pl.BlockSpec(w2.shape, lambda k: (0, 0)),
            pl.BlockSpec(b2.shape, lambda k: (0, 0)),
        ],
        out_specs=pl.BlockSpec((B, H), lambda k: (0, 0)),
        scratch_shapes=[pltpu.VMEM((B, H), jnp.float32)],
        compiler_params=pltpu.CompilerParams(
            dimension_semantics=("arbitrary",),               # K reduction
            vmem_limit_bytes=_vmem_limit(foot_a, cap)),
        cost_estimate=pl.CostEstimate(
            flops=2 * B * (x.shape[1] * H + H * H),
            transcendentals=0,
            bytes_accessed=(x.size * 4 + w1.size * 2 + b1.size * 4
                            + w2.size * 2 + b2.size * 4 + B * H * 2)),
    )(x, w1, b1, w2, b2)

    # ---- split path: layer 3, W3 streamed over lane-dense N tiles -----------
    foot_b = 2 * B * H * 2 + tile_3
    out_p = pl.pallas_call(
        _output_kernel,
        out_shape=jax.ShapeDtypeStruct((B, out_dim_p), jnp.float32),
        grid=(n_tiles,),
        in_specs=[
            pl.BlockSpec((B, H), lambda j: (0, 0)),      # hidden stays resident
            pl.BlockSpec((H, tn), lambda j: (0, j)),     # W3 tile streamed
            pl.BlockSpec((1, tn), lambda j: (0, j)),
        ],
        out_specs=pl.BlockSpec((B, tn), lambda j: (0, j)),
        compiler_params=pltpu.CompilerParams(
            dimension_semantics=("parallel",),
            vmem_limit_bytes=_vmem_limit(foot_b, cap)),
        cost_estimate=pl.CostEstimate(
            flops=2 * B * H * out_dim_p,
            transcendentals=B * out_dim_p,
            bytes_accessed=(B * H * 2 + w3.size * 2 + b3.size * 4
                            + B * out_dim_p * 4)),
    )(h2, w3, b3)

    return out_p[:, :out_dim].reshape(B, 1, img_size, img_size)


# --------------------------------------------------------------------------
# Parameter init mirroring the PyTorch module, BN (eval) folded into linears.
# --------------------------------------------------------------------------
def init_params(key, fmri_dim, hidden_dim, img_size):
    eps = 1e-5
    keys = jax.random.split(key, 6)

    def linear_init(kw, kb, fan_in, fan_out):
        bound = 1.0 / jnp.sqrt(jnp.float32(fan_in))
        # stored as (in, out) so the kernel computes x @ W
        w = jax.random.uniform(kw, (fan_in, fan_out), jnp.float32, -bound, bound)
        b = jax.random.uniform(kb, (1, fan_out), jnp.float32, -bound, bound)
        return w, b

    w1, b1 = linear_init(keys[0], keys[1], fmri_dim, hidden_dim)
    w2, b2 = linear_init(keys[2], keys[3], hidden_dim, hidden_dim)
    w3, b3 = linear_init(keys[4], keys[5], hidden_dim, img_size * img_size)

    # BatchNorm1d defaults (eval mode): gamma=1, beta=0, running_mean=0, var=1.
    gamma = jnp.ones((hidden_dim,), jnp.float32)
    beta = jnp.zeros((hidden_dim,), jnp.float32)
    rmean = jnp.zeros((hidden_dim,), jnp.float32)
    rvar = jnp.ones((hidden_dim,), jnp.float32)

    def fold_bn(w, b):
        s = gamma / jnp.sqrt(rvar + eps)          # per-output-feature scale
        t = beta - rmean * s
        w_f = (w * s[None, :]).astype(jnp.bfloat16)
        b_f = b * s[None, :] + t[None, :]
        return w_f, b_f

    w1f, b1f = fold_bn(w1, b1)
    w2f, b2f = fold_bn(w2, b2)

    return (w1f, b1f, w2f, b2f, w3.astype(jnp.bfloat16), b3)


def _reference_forward(x, params, img_size):
    """Pure-JAX reference with the same bf16-input / f32-accumulate numerics."""
    w1, b1, w2, b2, w3, b3 = params
    h = jnp.maximum(jnp.dot(x.astype(jnp.bfloat16), w1,
                            preferred_element_type=jnp.float32) + b1, 0.0)
    h = jnp.maximum(jnp.dot(h.astype(jnp.bfloat16), w2,
                            preferred_element_type=jnp.float32) + b2, 0.0)
    o = jnp.tanh(jnp.dot(h.astype(jnp.bfloat16), w3,
                         preferred_element_type=jnp.float32) + b3)
    return o.reshape(x.shape[0], 1, img_size, img_size)


if __name__ == "__main__":
    key = jax.random.PRNGKey(0)

    # -- Test 1: small shapes -> fused single-kernel path ---------------------
    B, fmri_dim, hidden_dim, img_size = 8, 32, 32, 8
    k_x, k_p, key = jax.random.split(key, 3)
    x = jax.random.normal(k_x, (B, fmri_dim), jnp.float32)
    params = init_params(k_p, fmri_dim, hidden_dim, img_size)

    img = generator_forward(x, params, img_size)
    jax.block_until_ready(img)
    assert img.shape == (B, 1, img_size, img_size)
    assert img.dtype == jnp.float32
    ref = _reference_forward(x, params, img_size)
    assert float(jnp.max(jnp.abs(img - ref))) < 5e-2

    # -- Test 2: larger fmri_dim -> forced split path (K-tiled W1 streaming) --
    B2, fmri2, hidden2, img2 = 8, 384, 256, 16
    k_x2, k_p2, key = jax.random.split(key, 3)
    x2 = jax.random.normal(k_x2, (B2, fmri2), jnp.float32)
    params2 = init_params(k_p2, fmri2, hidden2, img2)

    out2 = generator_forward(x2, params2, img2, tk_max=128, force_split=True)
    jax.block_until_ready(out2)
    assert out2.shape == (B2, 1, img2, img2)
    ref2 = _reference_forward(x2, params2, img2)
    assert float(jnp.max(jnp.abs(out2 - ref2))) < 5e-2

    print("KERNEL_OK")
</pallas_src>

<mosaic_0001>
module attributes {stable_mosaic.version = 11 : i64} {
  func.func @_fused_kernel(%arg0: i32, %arg1: memref<8x32xf32, #tpu.memory_space<vmem>>, %arg2: memref<32x32xbf16, #tpu.memory_space<vmem>>, %arg3: memref<1x32xf32, #tpu.memory_space<vmem>>, %arg4: memref<32x32xbf16, #tpu.memory_space<vmem>>, %arg5: memref<1x32xf32, #tpu.memory_space<vmem>>, %arg6: memref<32x64xbf16, #tpu.memory_space<vmem>>, %arg7: memref<1x64xf32, #tpu.memory_space<vmem>>, %arg8: memref<8x64xf32, #tpu.memory_space<vmem>>) attributes {dimension_semantics = [#tpu.dimension_semantics<parallel>], iteration_bounds = array<i64: 1>, scalar_prefetch = 0 : i64, scratch_operands = 0 : i64, tpu.core_type = #tpu.core_type<tc>, window_params = [{pipeline_mode = #tpu.pipeline_mode<synchronous>, transform_indices = @transform_0, window_bounds = array<i64: 8, 32>}, {pipeline_mode = #tpu.pipeline_mode<synchronous>, transform_indices = @transform_1, window_bounds = array<i64: 32, 32>}, {pipeline_mode = #tpu.pipeline_mode<synchronous>, transform_indices = @transform_2, window_bounds = array<i64: 1, 32>}, {pipeline_mode = #tpu.pipeline_mode<synchronous>, transform_indices = @transform_3, window_bounds = array<i64: 32, 32>}, {pipeline_mode = #tpu.pipeline_mode<synchronous>, transform_indices = @transform_4, window_bounds = array<i64: 1, 32>}, {transform_indices = @transform_5, window_bounds = array<i64: 32, 64>}, {transform_indices = @transform_6, window_bounds = array<i64: 1, 64>}, {transform_indices = @transform_7, window_bounds = array<i64: 8, 64>}]} {
    %c0 = arith.constant 0 : index
    %c0_0 = arith.constant 0 : index
    %0 = vector.load %arg1[%c0, %c0_0] : memref<8x32xf32, #tpu.memory_space<vmem>>, vector<8x32xf32>
    %1 = arith.truncf %0 : vector<8x32xf32> to vector<8x32xbf16>
    %c0_1 = arith.constant 0 : index
    %c0_2 = arith.constant 0 : index
    %2 = vector.load %arg2[%c0_1, %c0_2] : memref<32x32xbf16, #tpu.memory_space<vmem>>, vector<32x32xbf16>
    %cst = arith.constant dense<0.000000e+00> : vector<8x32xf32>
    %3 = tpu.matmul %1, %2, %cst {dimension_numbers = #tpu.dot_dimension_numbers<[1], [0], [0], [1], [0, 0, 1, 1], [], []>} : vector<8x32xbf16>, vector<32x32xbf16>, vector<8x32xf32> -> vector<8x32xf32>
    %c0_3 = arith.constant 0 : index
    %c0_4 = arith.constant 0 : index
    %4 = vector.load %arg3[%c0_3, %c0_4] : memref<1x32xf32, #tpu.memory_space<vmem>>, vector<1x32xf32>
    %5 = vector.broadcast %4 : vector<1x32xf32> to vector<8x32xf32>
    %6 = arith.addf %3, %5 : vector<8x32xf32>
    %cst_5 = arith.constant 0.000000e+00 : f32
    %7 = vector.broadcast %cst_5 : f32 to vector<8x32xf32>
    %8 = arith.maximumf %6, %7 : vector<8x32xf32>
    %9 = arith.truncf %8 : vector<8x32xf32> to vector<8x32xbf16>
    %c0_6 = arith.constant 0 : index
    %c0_7 = arith.constant 0 : index
    %10 = vector.load %arg4[%c0_6, %c0_7] : memref<32x32xbf16, #tpu.memory_space<vmem>>, vector<32x32xbf16>
    %cst_8 = arith.constant dense<0.000000e+00> : vector<8x32xf32>
    %11 = tpu.matmul %9, %10, %cst_8 {dimension_numbers = #tpu.dot_dimension_numbers<[1], [0], [0], [1], [0, 0, 1, 1], [], []>} : vector<8x32xbf16>, vector<32x32xbf16>, vector<8x32xf32> -> vector<8x32xf32>
    %c0_9 = arith.constant 0 : index
    %c0_10 = arith.constant 0 : index
    %12 = vector.load %arg5[%c0_9, %c0_10] : memref<1x32xf32, #tpu.memory_space<vmem>>, vector<1x32xf32>
    %13 = vector.broadcast %12 : vector<1x32xf32> to vector<8x32xf32>
    %14 = arith.addf %11, %13 : vector<8x32xf32>
    %cst_11 = arith.constant 0.000000e+00 : f32
    %15 = vector.broadcast %cst_11 : f32 to vector<8x32xf32>
    %16 = arith.maximumf %14, %15 : vector<8x32xf32>
    %17 = arith.truncf %16 : vector<8x32xf32> to vector<8x32xbf16>
    %c0_12 = arith.constant 0 : index
    %c0_13 = arith.constant 0 : index
    %18 = vector.load %arg6[%c0_12, %c0_13] : memref<32x64xbf16, #tpu.memory_space<vmem>>, vector<32x64xbf16>
    %cst_14 = arith.constant dense<0.000000e+00> : vector<8x64xf32>
    %19 = tpu.matmul %17, %18, %cst_14 {dimension_numbers = #tpu.dot_dimension_numbers<[1], [0], [0], [1], [0, 0, 1, 1], [], []>} : vector<8x32xbf16>, vector<32x64xbf16>, vector<8x64xf32> -> vector<8x64xf32>
    %c0_15 = arith.constant 0 : index
    %c0_16 = arith.constant 0 : index
    %20 = vector.load %arg7[%c0_15, %c0_16] : memref<1x64xf32, #tpu.memory_space<vmem>>, vector<1x64xf32>
    %21 = vector.broadcast %20 : vector<1x64xf32> to vector<8x64xf32>
    %22 = arith.addf %19, %21 : vector<8x64xf32>
    %23 = math.tanh %22 : vector<8x64xf32>
    %c0_17 = arith.constant 0 : index
    %c0_18 = arith.constant 0 : index
    %24 = vector.load %arg8[%c0_17, %c0_18] : memref<8x64xf32, #tpu.memory_space<vmem>>, vector<8x64xf32>
    tpu.vector_store %arg8[%c0_17, %c0_18], %23 {strides = array<i32>} : memref<8x64xf32, #tpu.memory_space<vmem>>, vector<8x64xf32>,
    return
  }
  func.func @transform_0(%arg0: i32) -> (i32, i32) {
    %c0_i32 = arith.constant 0 : i32
    %c0_i32_0 = arith.constant 0 : i32
    %c0_i32_1 = arith.constant 0 : i32
    return %c0_i32, %c0_i32_0 : i32, i32
  }
  func.func @transform_1(%arg0: i32) -> (i32, i32) {
    %c0_i32 = arith.constant 0 : i32
    %c0_i32_0 = arith.constant 0 : i32
    %c0_i32_1 = arith.constant 0 : i32
    return %c0_i32, %c0_i32_0 : i32, i32
  }
  func.func @transform_2(%arg0: i32) -> (i32, i32) {
    %c0_i32 = arith.constant 0 : i32
    %c0_i32_0 = arith.constant 0 : i32
    %c0_i32_1 = arith.constant 0 : i32
    return %c0_i32, %c0_i32_0 : i32, i32
  }
  func.func @transform_3(%arg0: i32) -> (i32, i32) {
    %c0_i32 = arith.constant 0 : i32
    %c0_i32_0 = arith.constant 0 : i32
    %c0_i32_1 = arith.constant 0 : i32
    return %c0_i32, %c0_i32_0 : i32, i32
  }
  func.func @transform_4(%arg0: i32) -> (i32, i32) {
    %c0_i32 = arith.constant 0 : i32
    %c0_i32_0 = arith.constant 0 : i32
    %c0_i32_1 = arith.constant 0 : i32
    return %c0_i32, %c0_i32_0 : i32, i32
  }
  func.func @transform_5(%arg0: i32) -> (i32, i32) {
    %c0_i32 = arith.constant 0 : i32
    %c0_i32_0 = arith.constant 0 : i32
    return %c0_i32, %arg0 : i32, i32
  }
  func.func @transform_6(%arg0: i32) -> (i32, i32) {
    %c0_i32 = arith.constant 0 : i32
    %c0_i32_0 = arith.constant 0 : i32
    return %c0_i32, %arg0 : i32, i32
  }
  func.func @transform_7(%arg0: i32) -> (i32, i32) {
    %c0_i32 = arith.constant 0 : i32
    %c0_i32_0 = arith.constant 0 : i32
    return %c0_i32, %arg0 : i32, i32
  }
}

</mosaic_0001>

<llo_original>
// kernel: tpu_custom_call.1
$region0: #{tpu_custom_call.1}
  #allocation0 [shape = 'u32[]', space=smem, size = 0x4, offset = 0x4, fixed_abs, tag = 'smem constant byte address 0x4 - core index']
  #allocation1 [shape = 'u32[144,128]{1,0:T(1,128)}', space=vmem, size = 0x12000, scoped, tag = 'internal scratch']
  %s0 = inlined_call_operand.hbm [shape: f32[8,32], index: 0, kind: input, shape index: {}]
  %s1 = inlined_call_operand.hbm [shape: bf16[32,32], index: 1, kind: input, shape index: {}]
  %s2 = inlined_call_operand.vmem [shape: f32[1,32], index: 2, kind: input, shape index: {}]
  %s3 = inlined_call_operand.hbm [shape: bf16[32,32], index: 3, kind: input, shape index: {}]
  %s4 = inlined_call_operand.vmem [shape: f32[1,32], index: 4, kind: input, shape index: {}]
  %s5 = inlined_call_operand.vmem [shape: bf16[32,64], index: 5, kind: input, shape index: {}]
  %s6 = inlined_call_operand.vmem [shape: f32[1,64], index: 6, kind: input, shape index: {}]
  %s7 = inlined_call_operand.hbm [shape: f32[8,64], index: 7, kind: output, shape index: {}]
  %s8 = sld [smem:[#allocation0]]
  $region50: #{tpu_custom_call.1} parent=0
    _
  %s10 = ssub.s32 1, %s8
  %s11 = scalar_select 0, %s10, %s8
  $region1: #{tpu_custom_call.1} parent=0
    #allocation2 [shape = 'u8[4096]{0}', space=vmem, size = 0x1000, scoped, tag = 'input window, operand 0, single buffered']
    #allocation3 [shape = 's32[1]{0}', space=sflag, size = 0x4, scoped, tag = 'scoped memory for tpu_custom_call.1']
    #allocation4 [shape = 's32[1]{0}', space=sflag, size = 0x4, scoped, tag = 'scoped memory for tpu_custom_call.1']
    #allocation5 [shape = 'u8[8192]{0}', space=vmem, size = 0x2000, scoped, tag = 'input window, operand 1, single buffered']
    #allocation6 [shape = 's32[1]{0}', space=sflag, size = 0x4, scoped, tag = 'scoped memory for tpu_custom_call.1']
    #allocation7 [shape = 'u8[8192]{0}', space=vmem, size = 0x2000, scoped, tag = 'input window, operand 3, single buffered']
    #allocation8 [shape = 'u8[4096]{0}', space=vmem, size = 0x1000, scoped, tag = 'output window, operand 0, single buffered']
    %12 = vsyncpa [#allocation3], 0
    %13 = vsyncpa [#allocation6], 0
    %14 = vsyncpa [#allocation4], 0
    // Predicated region
    $region2: #{tpu_custom_call.1} parent=1 // pred_check
      _
    $region3: #{tpu_custom_call.1} parent=1 // pred_check_branch
      %16 = sbr.rel (0) target = $region5
    $region4: #{tpu_custom_call.1} parent=1 // pred_region
      %s18 = ssub.s32 128, 128
      %19 = vsyncadd [#allocation3], %s18
      %s21 = sshll.u32 [#allocation2], 4
      %s22 = int_to_ptr.vmem [resolvable:$true] %s21
      %24 = dma.hbm_to_vmem [thread:$0]  %s0, 128, %s22, [#allocation3]
    $region5: #{tpu_custom_call.1} parent=1 // pred_fallthru
      _
    // Predicated region
    $region6: #{tpu_custom_call.1} parent=1 // pred_check
      _
    $region7: #{tpu_custom_call.1} parent=1 // pred_check_branch
      %26 = sbr.rel (0) target = $region9
    $region8: #{tpu_custom_call.1} parent=1 // pred_region
      %s28 = ssub.s32 256, 256
      %29 = vsyncadd [#allocation6], %s28
      %s30 = sshll.u32 [#allocation5], 4
      %s31 = int_to_ptr.vmem [resolvable:$true] %s30
      %36 = dma.hbm_to_vmem [thread:$0]  %s1, 256, %s31, [#allocation6], 64, 64, 4
    $region9: #{tpu_custom_call.1} parent=1 // pred_fallthru
      _
    // Predicated region
    $region10: #{tpu_custom_call.1} parent=1 // pred_check
      _
    $region11: #{tpu_custom_call.1} parent=1 // pred_check_branch
      %38 = sbr.rel (0) target = $region13
    $region12: #{tpu_custom_call.1} parent=1 // pred_region
      _
    $region13: #{tpu_custom_call.1} parent=1 // pred_fallthru
      _
    // Predicated region
    $region14: #{tpu_custom_call.1} parent=1 // pred_check
      _
    $region15: #{tpu_custom_call.1} parent=1 // pred_check_branch
      %40 = sbr.rel (0) target = $region17
    $region16: #{tpu_custom_call.1} parent=1 // pred_region
      %s42 = ssub.s32 256, 256
      %43 = vsyncadd [#allocation6], %s42
      %s44 = sshll.u32 [#allocation7], 4
      %s45 = int_to_ptr.vmem [resolvable:$true] %s44
      %50 = dma.hbm_to_vmem [thread:$0]  %s3, 256, %s45, [#allocation6], 64, 64, 4
    $region17: #{tpu_custom_call.1} parent=1 // pred_fallthru
      _
    // Predicated region
    $region18: #{tpu_custom_call.1} parent=1 // pred_check
      _
    $region19: #{tpu_custom_call.1} parent=1 // pred_check_branch
      %52 = sbr.rel (0) target = $region21
    $region20: #{tpu_custom_call.1} parent=1 // pred_region
      _
    $region21: #{tpu_custom_call.1} parent=1 // pred_fallthru
      _
    // Predicated region
    $region22: #{tpu_custom_call.1} parent=1 // pred_check
      _
    $region23: #{tpu_custom_call.1} parent=1 // pred_check_branch
      %54 = sbr.rel (0) target = $region25
    $region24: #{tpu_custom_call.1} parent=1 // pred_region
      _
    $region25: #{tpu_custom_call.1} parent=1 // pred_fallthru
      _
    // Predicated region
    $region26: #{tpu_custom_call.1} parent=1 // pred_check
      _
    $region27: #{tpu_custom_call.1} parent=1 // pred_check_branch
      %56 = sbr.rel (0) target = $region29
    $region28: #{tpu_custom_call.1} parent=1 // pred_region
      _
    $region29: #{tpu_custom_call.1} parent=1 // pred_fallthru
      _
    // Predicated region
    $region30: #{tpu_custom_call.1} parent=1 // pred_check
      _
    $region31: #{tpu_custom_call.1} parent=1 // pred_check_branch
      %58 = sbr.rel (0) target = $region33
    $region32: #{tpu_custom_call.1} parent=1 // pred_region
      %59 = dma.done [#allocation3], 128
    $region33: #{tpu_custom_call.1} parent=1 // pred_fallthru
      _
    // Predicated region
    $region34: #{tpu_custom_call.1} parent=1 // pred_check
      _
    $region35: #{tpu_custom_call.1} parent=1 // pred_check_branch
      %61 = sbr.rel (0) target = $region37
    $region36: #{tpu_custom_call.1} parent=1 // pred_region
      %62 = dma.done [#allocation6], 256
    $region37: #{tpu_custom_call.1} parent=1 // pred_fallthru
      _
    // Predicated region
    $region38: #{tpu_custom_call.1} parent=1 // pred_check
      _
    $region39: #{tpu_custom_call.1} parent=1 // pred_check_branch
      %64 = sbr.rel (0) target = $region41
    $region40: #{tpu_custom_call.1} parent=1 // pred_region
      %65 = dma.done [#allocation6], 256
    $region41: #{tpu_custom_call.1} parent=1 // pred_fallthru
      _
    %v67 = vld [vmem:[#allocation2] sm:$0xff]
    %v68 = vpack.c.bf16 %v67, %v67
    %v69 = vld [vmem:[#allocation5] sm:$0xf]
    %v70 = vld [vmem:[#allocation5 + $0x4] sm:$0xf]
    %v71 = vld [vmem:[#allocation5 + $0x8] sm:$0xf]
    %v72 = vld [vmem:[#allocation5 + $0xc] sm:$0xf]
    %v73 = vld [vmem:[%s2] sm:$0x1]
    %v75 = vlaneseq
    %v76 = vshrl.u32 %v75, 7
    %v77 = vsub.s32 0, %v76
    %v78 = vrot.slane %v73, %v77
    %v84 = vunpack.c.l.b16 %v69
    %v85 = vunpack.c.l.b16 %v70
    %v86 = vunpack.c.l.b16 %v71
    %v87 = vunpack.c.l.b16 %v72
    %v88 = vpack.c.b16 %v85, %v84
    %v89 = vpack.c.b16 %v87, %v86
    %vm92 = vcmask 261120
    %v94 = vsel %vm92, %v68, 0
    %96 = vmatprep.subr.bf16.mxu0 0
    %97 = vmatpush1.bf16.msra.mxu0 %v88
    %98 = vmatprep.subr.bf16.mxu0 0
    %99 = vmatpush1.bf16.msra.mxu0 %v89
    %100 = vmatprep.subr.bf16.mxu0 0
    %101 = vmatpush1.bf16.msra.mxu0 0
    %102 = vmatprep.subr.bf16.mxu0 0
    %103 = vmatpush1.bf16.msra.mxu0 0
    %104 = vmatprep.subr.bf16.mxu0 0
    %105 = vmatpush1.bf16.msra.mxu0 0
    %106 = vmatprep.subr.bf16.mxu0 0
    %107 = vmatpush1.bf16.msra.mxu0 0
    %108 = vmatprep.subr.bf16.mxu0 0
    %109 = vmatpush1.bf16.msra.mxu0 0
    %110 = vmatprep.subr.bf16.mxu0 0
    %111 = vmatpush1.bf16.msra.mxu0 0
    %112 = vmatprep.subr.bf16.mxu0 0
    %113 = vmatpush1.bf16.msra.mxu0 0
    %114 = vmatprep.subr.bf16.mxu0 0
    %115 = vmatpush1.bf16.msra.mxu0 0
    %116 = vmatprep.subr.bf16.mxu0 0
    %117 = vmatpush1.bf16.msra.mxu0 0
    %118 = vmatprep.subr.bf16.mxu0 0
    %119 = vmatpush1.bf16.msra.mxu0 0
    %120 = vmatprep.subr.bf16.mxu0 0
    %121 = vmatpush1.bf16.msra.mxu0 0
    %122 = vmatprep.subr.bf16.mxu0 0
    %123 = vmatpush1.bf16.msra.mxu0 0
    %124 = vmatprep.subr.bf16.mxu0 0
    %125 = vmatpush1.bf16.msra.mxu0 0
    %126 = vmatprep.subr.bf16.mxu0 0
    %127 = vmatpush1.bf16.msra.mxu0 0
    %128 = vmatprep.mubr.bf16.mxu0 0
    %129 = vmatmul.mubr.bf16.gmra.mrb[0].mxu0 %v94
    %v130 = vpop.f32.mrb[0].mxu0
    %v131 = vadd.f32 %v78, %v130
    %v132 = vpop.f32.mrb[0].mxu0
    %v133 = vpop.f32.mrb[0].mxu0
    %v134 = vpop.f32.mrb[0].mxu0
    %135 = vdwg.mxu0
    %v136 = vmax.f32 %v131, 0.0
    %v137 = vpack.c.bf16 %v136, %v136
    %v138 = vld [vmem:[#allocation7] sm:$0xf]
    %v139 = vld [vmem:[#allocation7 + $0x4] sm:$0xf]
    %v140 = vld [vmem:[#allocation7 + $0x8] sm:$0xf]
    %v141 = vld [vmem:[#allocation7 + $0xc] sm:$0xf]
    %v142 = vld [vmem:[%s4] sm:$0x1]
    %v144 = vlaneseq
    %v145 = vshrl.u32 %v144, 7
    %v146 = vsub.s32 0, %v145
    %v147 = vrot.slane %v142, %v146
    %v153 = vunpack.c.l.b16 %v138
    %v154 = vunpack.c.l.b16 %v139
    %v155 = vunpack.c.l.b16 %v140
    %v156 = vunpack.c.l.b16 %v141
    %v157 = vpack.c.b16 %v154, %v153
    %v158 = vpack.c.b16 %v156, %v155
    %v162 = vsel %vm92, %v137, 0
    %164 = vmatprep.subr.bf16.mxu0 0
    %165 = vmatpush1.bf16.msra.mxu0 %v157
    %166 = vmatprep.subr.bf16.mxu0 0
    %167 = vmatpush1.bf16.msra.mxu0 %v158
    %168 = vmatprep.subr.bf16.mxu0 0
    %169 = vmatpush1.bf16.msra.mxu0 0
    %170 = vmatprep.subr.bf16.mxu0 0
    %171 = vmatpush1.bf16.msra.mxu0 0
    %172 = vmatprep.subr.bf16.mxu0 0
    %173 = vmatpush1.bf16.msra.mxu0 0
    %174 = vmatprep.subr.bf16.mxu0 0
    %175 = vmatpush1.bf16.msra.mxu0 0
    %176 = vmatprep.subr.bf16.mxu0 0
    %177 = vmatpush1.bf16.msra.mxu0 0
    %178 = vmatprep.subr.bf16.mxu0 0
    %179 = vmatpush1.bf16.msra.mxu0 0
    %180 = vmatprep.subr.bf16.mxu0 0
    %181 = vmatpush1.bf16.msra.mxu0 0
    %182 = vmatprep.subr.bf16.mxu0 0
    %183 = vmatpush1.bf16.msra.mxu0 0
    %184 = vmatprep.subr.bf16.mxu0 0
    %185 = vmatpush1.bf16.msra.mxu0 0
    %186 = vmatprep.subr.bf16.mxu0 0
    %187 = vmatpush1.bf16.msra.mxu0 0
    %188 = vmatprep.subr.bf16.mxu0 0
    %189 = vmatpush1.bf16.msra.mxu0 0
    %190 = vmatprep.subr.bf16.mxu0 0
    %191 = vmatpush1.bf16.msra.mxu0 0
    %192 = vmatprep.subr.bf16.mxu0 0
    %193 = vmatpush1.bf16.msra.mxu0 0
    %194 = vmatprep.subr.bf16.mxu0 0
    %195 = vmatpush1.bf16.msra.mxu0 0
    %196 = vmatprep.mubr.bf16.mxu0 0
    %197 = vmatmul.mubr.bf16.gmra.mrb[0].mxu0 %v162
    %v198 = vpop.f32.mrb[0].mxu0
    %v199 = vadd.f32 %v147, %v198
    %v200 = vpop.f32.mrb[0].mxu0
    %v201 = vpop.f32.mrb[0].mxu0
    %v202 = vpop.f32.mrb[0].mxu0
    %203 = vdwg.mxu0
    %v204 = vmax.f32 %v199, 0.0
    %v205 = vpack.c.bf16 %v204, %v204
    %v206 = vld [vmem:[%s5] sm:$0xf]
    %v207 = vld [vmem:[%s5 + $0x4] sm:$0xf]
    %v208 = vld [vmem:[%s5 + $0x8] sm:$0xf]
    %v209 = vld [vmem:[%s5 + $0xc] sm:$0xf]
    %v210 = vld [vmem:[%s6] sm:$0x1]
    %v212 = vlaneseq
    %v213 = vshrl.u32 %v212, 7
    %v214 = vsub.s32 0, %v213
    %v215 = vrot.slane %v210, %v214
    %v221 = vunpack.c.l.b16 %v206
    %v222 = vunpack.c.l.b16 %v207
    %v223 = vunpack.c.l.b16 %v208
    %v224 = vunpack.c.l.b16 %v209
    %v225 = vpack.c.b16 %v222, %v221
    %v226 = vpack.c.b16 %v224, %v223
    %v230 = vsel %vm92, %v205, 0
    %232 = vmatprep.subr.bf16.mxu0 0
    %233 = vmatpush1.bf16.msra.mxu0 %v225
    %234 = vmatprep.subr.bf16.mxu0 0
    %235 = vmatpush1.bf16.msra.mxu0 %v226
    %236 = vmatprep.subr.bf16.mxu0 0
    %237 = vmatpush1.bf16.msra.mxu0 0
    %238 = vmatprep.subr.bf16.mxu0 0
    %239 = vmatpush1.bf16.msra.mxu0 0
    %240 = vmatprep.subr.bf16.mxu0 0
    %241 = vmatpush1.bf16.msra.mxu0 0
    %242 = vmatprep.subr.bf16.mxu0 0
    %243 = vmatpush1.bf16.msra.mxu0 0
    %244 = vmatprep.subr.bf16.mxu0 0
    %245 = vmatpush1.bf16.msra.mxu0 0
    %246 = vmatprep.subr.bf16.mxu0 0
    %247 = vmatpush1.bf16.msra.mxu0 0
    %248 = vmatprep.subr.bf16.mxu0 0
    %249 = vmatpush1.bf16.msra.mxu0 0
    %250 = vmatprep.subr.bf16.mxu0 0
    %251 = vmatpush1.bf16.msra.mxu0 0
    %252 = vmatprep.subr.bf16.mxu0 0
    %253 = vmatpush1.bf16.msra.mxu0 0
    %254 = vmatprep.subr.bf16.mxu0 0
    %255 = vmatpush1.bf16.msra.mxu0 0
    %256 = vmatprep.subr.bf16.mxu0 0
    %257 = vmatpush1.bf16.msra.mxu0 0
    %258 = vmatprep.subr.bf16.mxu0 0
    %259 = vmatpush1.bf16.msra.mxu0 0
    %260 = vmatprep.subr.bf16.mxu0 0
    %261 = vmatpush1.bf16.msra.mxu0 0
    %262 = vmatprep.subr.bf16.mxu0 0
    %263 = vmatpush1.bf16.msra.mxu0 0
    %264 = vmatprep.mubr.bf16.mxu0 0
    %265 = vmatmul.mubr.bf16.gmra.mrb[0].mxu0 %v230
    %v266 = vpop.f32.mrb[0].mxu0
    %v267 = vadd.f32 %v215, %v266
    %v268 = vpop.f32.mrb[0].mxu0
    %v269 = vpop.f32.mrb[0].mxu0
    %v270 = vpop.f32.mrb[0].mxu0
    %271 = vdwg.mxu0
    %v272 = vtanh.pop %v267
    %vm273 = vcmask 523264
    %274 = vst.msk [vmem:[#allocation8] sm:$0xff] %vm273, %v272
    // Predicated region
    $region42: #{tpu_custom_call.1} parent=1 // pred_check
      _
    $region43: #{tpu_custom_call.1} parent=1 // pred_check_branch
      %276 = sbr.rel (0) target = $region45
    $region44: #{tpu_custom_call.1} parent=1 // pred_region
      %s278 = ssub.s32 128, 128
      %279 = vsyncadd [#allocation4], %s278
      %s281 = sshll.u32 [#allocation8], 4
      %s282 = int_to_ptr.vmem [resolvable:$true] %s281
      %284 = dma.vmem_to_hbm [thread:$0]  %s282, 128, %s7, [#allocation4]
    $region45: #{tpu_custom_call.1} parent=1 // pred_fallthru
      _
    // Predicated region
    $region46: #{tpu_custom_call.1} parent=1 // pred_check
      _
    $region47: #{tpu_custom_call.1} parent=1 // pred_check_branch
      %286 = sbr.rel (0) target = $region49
    $region48: #{tpu_custom_call.1} parent=1 // pred_region
      %287 = dma.done [#allocation4], 128
    $region49: #{tpu_custom_call.1} parent=1 // pred_fallthru
      _
    %288 = vsyncpa [#allocation3], 1
    %289 = vsyncpa [#allocation6], 1
    %290 = vsyncpa [#allocation4], 1

</llo_original>
